<compile_context>
chip_gen: v7x
topology: tpu7x:2x2x1
jax: 0.10.0
libtpu: 0.0.40
codegen_flags: <defaults>
</compile_context>

<pallas_src>
import jax
import jax.numpy as jnp
from jax.experimental import pallas as pl
from jax.experimental.pallas import tpu as pltpu


def _round_up(x, m):
    return (x + m - 1) // m * m


def _make_kernel(B_blk, C_bn, K, dilation, pad, T_true, T_p, compute_dtype):
    W = B_blk * T_p  # lane width of every stacked operand / result

    def kernel(x_ref, s1_ref, b1_ref, w1_ref, s2_ref, b2_ref, w2_ref, bias_ref, o_ref):
        f32 = jnp.float32
        s1 = s1_ref[...]
        b1 = b1_ref[...]
        s2 = s2_ref[...]
        b2 = b2_ref[...]

        # ---- nonlinear1: folded BatchNorm1d + ReLU, lane-stacked over the batch block
        ys = []
        for b in range(B_blk):
            xb = x_ref[b].astype(f32)                                  # (C_in, T_p)
            ys.append(jnp.maximum(xb * s1 + b1, 0.0))
        y = jnp.concatenate(ys, axis=1) if B_blk > 1 else ys[0]        # (C_in, W)

        # ---- linear1: one wide, lane-dense MXU matmul (bf16 operands, f32 acc)
        z = jnp.dot(w1_ref[...], y.astype(compute_dtype),
                    preferred_element_type=f32)                        # (C_bn, W)

        # ---- nonlinear2: folded BatchNorm1d + ReLU (f32), then cast once for the MXU
        u = jnp.maximum(z * s2 + b2, 0.0).astype(compute_dtype)        # (C_bn, W)

        # ---- linear2 (TimeDelay): ONE stacked matmul over a (K*C_bn, W) operand.
        # Band k holds u time-shifted by (k*dilation - pad); columns that would read
        # outside the true [0, T_true) range of *their own sample* are masked to zero
        # (this also kills the T_true..T_p padding garbage and any cross-sample leak).
        t_loc = jax.lax.broadcasted_iota(jnp.int32, (1, W), 1) % T_p   # per-sample time
        bands = []
        for k in range(K):
            s = k * dilation - pad                                     # static shift
            if s == 0:
                shifted = u
            elif s > 0:
                shifted = jnp.concatenate(
                    [u[:, s:], jnp.zeros((C_bn, s), compute_dtype)], axis=1)
            else:
                shifted = jnp.concatenate(
                    [jnp.zeros((C_bn, -s), compute_dtype), u[:, :W + s]], axis=1)
            lo = max(0, -s)
            hi = min(T_p, T_true - s)
            if lo == 0 and hi >= T_p:
                bands.append(shifted)
            else:
                m = (t_loc >= lo) & (t_loc < hi)
                bands.append(jnp.where(m, shifted, jnp.zeros_like(shifted)))
        operand = jnp.concatenate(bands, axis=0)                       # (K*C_bn, W)

        res = jnp.dot(w2_ref[...], operand, preferred_element_type=f32)  # (C_out, W)
        res = res + bias_ref[...]

        # ---- lane-dense stores back into the (B_blk, C_out, T_p) output block
        for b in range(B_blk):
            o_ref[b] = res[:, b * T_p:(b + 1) * T_p].astype(o_ref.dtype)

    return kernel


def dense_tdnn_layer_pallas(x,
                            bn1_gamma, bn1_beta, bn1_mean, bn1_var,
                            linear1_weight,
                            bn2_gamma, bn2_beta, bn2_mean, bn2_var,
                            td_weight, td_bias=None,
                            *, kernel_size, stride=1, dilation=1, eps=1e-5,
                            compute_dtype=jnp.bfloat16, batch_block=None):
    """x: [N, C_in, T] -> [N, C_out, T] (matches DenseTDNNLayer.forward, inference BN)."""
    N, C_in, T = x.shape
    C_bn = linear1_weight.shape[0]
    C_out = td_weight.shape[0]
    K = kernel_size
    assert K % 2 == 1, "DenseTDNNLayer requires an odd kernel size"
    if stride != 1:
        # TODO(synk): strided TimeDelay (stride > 1) not implemented in the fused kernel.
        raise NotImplementedError("stride != 1 not supported")
    pad = (K - 1) // 2 * dilation
    T_p = _round_up(T, 128)          # lane-dense output tiles (128-multiple last dim)

    f32 = jnp.float32
    c_item = jnp.dtype(compute_dtype).itemsize
    x_item = jnp.dtype(x.dtype).itemsize

    # ---- choose how many batch samples to stack along the lane axis per grid step ----
    if batch_block is None:
        per_sample = T_p * (2 * C_in * x_item        # double-buffered input block
                            + 2 * C_out * x_item     # double-buffered output block
                            + C_in * 4               # y
                            + 2 * C_bn * 4           # z, u (f32)
                            + (K + 1) * C_bn * c_item  # stacked operand + u (compute dtype)
                            + C_out * 4)             # conv accumulator
        batch_block = max(1, (8 << 20) // per_sample)
        batch_block = min(batch_block, N)
        if N >= 2:
            # keep >= 2 grid steps so both v7x TensorCores get work
            batch_block = min(batch_block, pl.cdiv(N, 2))
    B_blk = int(max(1, batch_block))
    N_pad = _round_up(N, B_blk)

    # ---- pad batch / time for aligned, lane-dense blocks (sliced off afterwards) ----
    if (N_pad, T_p) != (N, T):
        x_in = jnp.pad(x, ((0, N_pad - N), (0, 0), (0, T_p - T)))
    else:
        x_in = x

    # ---- fold BatchNorm running stats + affine into per-channel scale/shift (C, 1) ----
    inv1 = 1.0 / jnp.sqrt(bn1_var.astype(f32) + eps)
    s1 = (bn1_gamma.astype(f32) * inv1).reshape(C_in, 1)
    b1 = (bn1_beta.astype(f32)
          - bn1_mean.astype(f32) * bn1_gamma.astype(f32) * inv1).reshape(C_in, 1)
    inv2 = 1.0 / jnp.sqrt(bn2_var.astype(f32) + eps)
    s2 = (bn2_gamma.astype(f32) * inv2).reshape(C_bn, 1)
    b2 = (bn2_beta.astype(f32)
          - bn2_mean.astype(f32) * bn2_gamma.astype(f32) * inv2).reshape(C_bn, 1)

    # Weights shipped to HBM already in the MXU compute dtype (bf16 by default).
    w1 = linear1_weight.astype(compute_dtype)                           # (C_bn, C_in)
    # TimeDelay weight [C_out, C_bn*K] (index c*K + k, channel-major tap-minor)
    #   -> tap-major stacked layout (C_out, K*C_bn) matching the stacked operand.
    w2 = (td_weight.astype(f32).reshape(C_out, C_bn, K)
          .transpose(0, 2, 1).reshape(C_out, K * C_bn).astype(compute_dtype))
    bias = (jnp.zeros((C_out,), f32) if td_bias is None
            else td_bias.astype(f32)).reshape(C_out, 1)

    kernel = _make_kernel(B_blk, C_bn, K, dilation, pad, T, T_p, compute_dtype)

    out = pl.pallas_call(
        kernel,
        out_shape=jax.ShapeDtypeStruct((N_pad, C_out, T_p), x.dtype),
        grid_spec=pltpu.PrefetchScalarGridSpec(
            num_scalar_prefetch=0,
            grid=(N_pad // B_blk,),
            in_specs=[
                pl.BlockSpec((B_blk, C_in, T_p), lambda i: (i, 0, 0)),  # x block
                pl.BlockSpec((C_in, 1), lambda i: (0, 0)),              # bn1 scale
                pl.BlockSpec((C_in, 1), lambda i: (0, 0)),              # bn1 shift
                pl.BlockSpec((C_bn, C_in), lambda i: (0, 0)),           # linear1 W
                pl.BlockSpec((C_bn, 1), lambda i: (0, 0)),              # bn2 scale
                pl.BlockSpec((C_bn, 1), lambda i: (0, 0)),              # bn2 shift
                pl.BlockSpec((C_out, K * C_bn), lambda i: (0, 0)),      # TDNN W (stacked)
                pl.BlockSpec((C_out, 1), lambda i: (0, 0)),             # TDNN bias
            ],
            out_specs=pl.BlockSpec((B_blk, C_out, T_p), lambda i: (i, 0, 0)),
        ),
        compiler_params=pltpu.CompilerParams(
            dimension_semantics=("parallel",),
            vmem_limit_bytes=48 * 1024 * 1024),
    )(x_in, s1, b1, w1, s2, b2, w2, bias)

    if (N_pad, T_p) != (N, T):
        out = out[:N, :, :T]
    return out


def dense_tdnn_layer_ref(x, g1, be1, m1, v1, w1, g2, be2, m2, v2, w2_flat, bias,
                         *, kernel_size, stride=1, dilation=1, eps=1e-5):
    """Pure-JAX reference matching the PyTorch forward (inference BatchNorm)."""
    K = kernel_size
    pad = (K - 1) // 2 * dilation
    inv1 = 1.0 / jnp.sqrt(v1 + eps)
    y = (x - m1[None, :, None]) * inv1[None, :, None] * g1[None, :, None] + be1[None, :, None]
    y = jnp.maximum(y, 0.0)
    z = jnp.einsum('oc,nct->not', w1, y)
    inv2 = 1.0 / jnp.sqrt(v2 + eps)
    u = (z - m2[None, :, None]) * inv2[None, :, None] * g2[None, :, None] + be2[None, :, None]
    u = jnp.maximum(u, 0.0)

    C_out = w2_flat.shape[0]
    C_bn = u.shape[1]
    w2 = w2_flat.reshape(C_out, C_bn, K)
    u_pad = jnp.pad(u, ((0, 0), (0, 0), (pad, pad)))
    T_out = (u.shape[2] + 2 * pad - dilation * (K - 1) - 1) // stride + 1
    out = jnp.zeros((x.shape[0], C_out, T_out), jnp.float32)
    for k in range(K):
        sl = u_pad[:, :, k * dilation: k * dilation + stride * (T_out - 1) + 1: stride]
        out = out + jnp.einsum('oc,nct->not', w2[:, :, k], sl)
    if bias is not None:
        out = out + bias[None, :, None]
    return out


if __name__ == "__main__":
    key = jax.random.PRNGKey(0)
    # T deliberately NOT a multiple of 128 to exercise the lane-padding + mask path.
    N, C_in, C_bn, C_out, T = 2, 48, 32, 16, 250
    K = 3

    ks = jax.random.split(key, 12)
    x = jax.random.normal(ks[0], (N, C_in, T), dtype=jnp.float32)
    g1 = 1.0 + 0.1 * jax.random.normal(ks[1], (C_in,), dtype=jnp.float32)
    be1 = 0.1 * jax.random.normal(ks[2], (C_in,), dtype=jnp.float32)
    m1 = 0.1 * jax.random.normal(ks[3], (C_in,), dtype=jnp.float32)
    v1 = jnp.abs(jax.random.normal(ks[4], (C_in,), dtype=jnp.float32)) + 0.5
    w1 = jax.random.normal(ks[5], (C_bn, C_in), dtype=jnp.float32) / (C_in ** 0.5)
    g2 = 1.0 + 0.1 * jax.random.normal(ks[6], (C_bn,), dtype=jnp.float32)
    be2 = 0.1 * jax.random.normal(ks[7], (C_bn,), dtype=jnp.float32)
    m2 = 0.1 * jax.random.normal(ks[8], (C_bn,), dtype=jnp.float32)
    v2 = jnp.abs(jax.random.normal(ks[9], (C_bn,), dtype=jnp.float32)) + 0.5
    w2 = jax.random.normal(ks[10], (C_out, C_bn * K), dtype=jnp.float32) / ((C_bn * K) ** 0.5)
    td_bias = 0.1 * jax.random.normal(ks[11], (C_out,), dtype=jnp.float32)

    configs = [
        # (dilation, bias,    compute_dtype, batch_block, tol)
        (1, None,    jnp.bfloat16, None, 5e-2),   # auto batch block -> 2 parallel steps
        (2, None,    jnp.bfloat16, 2,    5e-2),   # whole batch lane-stacked in one step
        (1, td_bias, jnp.float32,  1,    2e-3),   # f32 validation path (+ bias branch)
    ]
    for dilation, bias, cdt, b_blk, tol in configs:
        out = dense_tdnn_layer_pallas(
            x, g1, be1, m1, v1, w1, g2, be2, m2, v2, w2, bias,
            kernel_size=K, dilation=dilation,
            compute_dtype=cdt, batch_block=b_blk)
        out = jax.block_until_ready(out)

        ref = dense_tdnn_layer_ref(
            x, g1, be1, m1, v1, w1, g2, be2, m2, v2, w2, bias,
            kernel_size=K, dilation=dilation)

        assert out.shape == (N, C_out, T), out.shape
        assert jnp.allclose(out, ref, atol=tol, rtol=tol), \
            float(jnp.max(jnp.abs(out - ref)))

    print("KERNEL_OK")
</pallas_src>

<mosaic_0001>
module attributes {stable_mosaic.version = 11 : i64} {
  func.func @kernel(%arg0: i32, %arg1: memref<1x48x256xf32, #tpu.memory_space<vmem>>, %arg2: memref<48x1xf32, #tpu.memory_space<vmem>>, %arg3: memref<48x1xf32, #tpu.memory_space<vmem>>, %arg4: memref<32x48xbf16, #tpu.memory_space<vmem>>, %arg5: memref<32x1xf32, #tpu.memory_space<vmem>>, %arg6: memref<32x1xf32, #tpu.memory_space<vmem>>, %arg7: memref<16x96xbf16, #tpu.memory_space<vmem>>, %arg8: memref<16x1xf32, #tpu.memory_space<vmem>>, %arg9: memref<1x16x256xf32, #tpu.memory_space<vmem>>) attributes {dimension_semantics = [#tpu.dimension_semantics<parallel>], iteration_bounds = array<i64: 2>, scalar_prefetch = 0 : i64, scratch_operands = 0 : i64, tpu.core_type = #tpu.core_type<tc>, window_params = [{transform_indices = @transform_0, window_bounds = array<i64: 1, 48, 256>}, {pipeline_mode = #tpu.pipeline_mode<synchronous>, transform_indices = @transform_1, window_bounds = array<i64: 48, 1>}, {pipeline_mode = #tpu.pipeline_mode<synchronous>, transform_indices = @transform_2, window_bounds = array<i64: 48, 1>}, {pipeline_mode = #tpu.pipeline_mode<synchronous>, transform_indices = @transform_3, window_bounds = array<i64: 32, 48>}, {pipeline_mode = #tpu.pipeline_mode<synchronous>, transform_indices = @transform_4, window_bounds = array<i64: 32, 1>}, {pipeline_mode = #tpu.pipeline_mode<synchronous>, transform_indices = @transform_5, window_bounds = array<i64: 32, 1>}, {pipeline_mode = #tpu.pipeline_mode<synchronous>, transform_indices = @transform_6, window_bounds = array<i64: 16, 96>}, {pipeline_mode = #tpu.pipeline_mode<synchronous>, transform_indices = @transform_7, window_bounds = array<i64: 16, 1>}, {transform_indices = @transform_8, window_bounds = array<i64: 1, 16, 256>}]} {
    %c0 = arith.constant 0 : index
    %c0_0 = arith.constant 0 : index
    %0 = vector.load %arg2[%c0, %c0_0] : memref<48x1xf32, #tpu.memory_space<vmem>>, vector<48x1xf32>
    %c0_1 = arith.constant 0 : index
    %c0_2 = arith.constant 0 : index
    %1 = vector.load %arg3[%c0_1, %c0_2] : memref<48x1xf32, #tpu.memory_space<vmem>>, vector<48x1xf32>
    %c0_3 = arith.constant 0 : index
    %c0_4 = arith.constant 0 : index
    %2 = vector.load %arg5[%c0_3, %c0_4] : memref<32x1xf32, #tpu.memory_space<vmem>>, vector<32x1xf32>
    %c0_5 = arith.constant 0 : index
    %c0_6 = arith.constant 0 : index
    %3 = vector.load %arg6[%c0_5, %c0_6] : memref<32x1xf32, #tpu.memory_space<vmem>>, vector<32x1xf32>
    %c0_7 = arith.constant 0 : index
    %c0_8 = arith.constant 0 : index
    %c0_9 = arith.constant 0 : index
    %4 = vector.load %arg1[%c0_7, %c0_8, %c0_9] : memref<1x48x256xf32, #tpu.memory_space<vmem>>, vector<1x48x256xf32>
    %5 = vector.shape_cast %4 : vector<1x48x256xf32> to vector<48x256xf32>
    %6 = vector.broadcast %0 : vector<48x1xf32> to vector<48x256xf32>
    %7 = arith.mulf %5, %6 : vector<48x256xf32>
    %8 = vector.broadcast %1 : vector<48x1xf32> to vector<48x256xf32>
    %9 = arith.addf %7, %8 : vector<48x256xf32>
    %cst = arith.constant 0.000000e+00 : f32
    %10 = vector.broadcast %cst : f32 to vector<48x256xf32>
    %11 = arith.maximumf %9, %10 : vector<48x256xf32>
    %c0_10 = arith.constant 0 : index
    %c0_11 = arith.constant 0 : index
    %12 = vector.load %arg4[%c0_10, %c0_11] : memref<32x48xbf16, #tpu.memory_space<vmem>>, vector<32x48xbf16>
    %13 = arith.truncf %11 : vector<48x256xf32> to vector<48x256xbf16>
    %cst_12 = arith.constant dense<0.000000e+00> : vector<32x256xf32>
    %14 = tpu.matmul %12, %13, %cst_12 {dimension_numbers = #tpu.dot_dimension_numbers<[1], [0], [0], [1], [0, 0, 1, 1], [], []>} : vector<32x48xbf16>, vector<48x256xbf16>, vector<32x256xf32> -> vector<32x256xf32>
    %15 = vector.broadcast %2 : vector<32x1xf32> to vector<32x256xf32>
    %16 = arith.mulf %14, %15 : vector<32x256xf32>
    %17 = vector.broadcast %3 : vector<32x1xf32> to vector<32x256xf32>
    %18 = arith.addf %16, %17 : vector<32x256xf32>
    %cst_13 = arith.constant 0.000000e+00 : f32
    %19 = vector.broadcast %cst_13 : f32 to vector<32x256xf32>
    %20 = arith.maximumf %18, %19 : vector<32x256xf32>
    %21 = arith.truncf %20 : vector<32x256xf32> to vector<32x256xbf16>
    %22 = tpu.iota {dimensions = array<i32: 1>} : vector<1x256xi32>
    %c256_i32 = arith.constant 256 : i32
    %c0_i32 = arith.constant 0 : i32
    %23 = arith.cmpi eq, %c256_i32, %c0_i32 : i32
    %c1_i32 = arith.constant 1 : i32
    %24 = arith.select %23, %c1_i32, %c256_i32 : i32
    %25 = vector.broadcast %24 : i32 to vector<1x256xi32>
    %26 = arith.remsi %22, %25 : vector<1x256xi32>
    %c0_i32_14 = arith.constant 0 : i32
    %27 = vector.broadcast %c0_i32_14 : i32 to vector<1x256xi32>
    %28 = arith.cmpi ne, %26, %27 : vector<1x256xi32>
    %c0_i32_15 = arith.constant 0 : i32
    %29 = vector.broadcast %c0_i32_15 : i32 to vector<1x256xi32>
    %30 = arith.cmpi slt, %26, %29 : vector<1x256xi32>
    %c0_i32_16 = arith.constant 0 : i32
    %31 = arith.cmpi slt, %24, %c0_i32_16 : i32
    %32 = vector.broadcast %31 : i1 to vector<1x256xi1>
    %33 = vector.broadcast %32 : vector<1x256xi1> to vector<1x256xi1>
    %34 = arith.xori %30, %33 : vector<1x256xi1>
    %35 = arith.andi %34, %28 : vector<1x256xi1>
    %36 = vector.broadcast %24 : i32 to vector<1x256xi32>
    %37 = arith.addi %26, %36 : vector<1x256xi32>
    %38 = arith.select %35, %37, %26 : vector<1x256xi1>, vector<1x256xi32>
    %cst_17 = arith.constant 0.000000e+00 : bf16
    %39 = vector.broadcast %cst_17 : bf16 to vector<32x1xbf16>
    %40 = vector.extract_strided_slice %21 {offsets = [0, 0], sizes = [32, 255], strides = [1, 1]} : vector<32x256xbf16> to vector<32x255xbf16>
    %41 = tpu.concatenate %39, %40 in 1 : vector<32x1xbf16>, vector<32x255xbf16> -> vector<32x256xbf16>
    %c1_i32_18 = arith.constant 1 : i32
    %42 = vector.broadcast %c1_i32_18 : i32 to vector<1x256xi32>
    %43 = arith.cmpi sge, %38, %42 : vector<1x256xi32>
    %c251_i32 = arith.constant 251 : i32
    %44 = vector.broadcast %c251_i32 : i32 to vector<1x256xi32>
    %45 = arith.cmpi slt, %38, %44 : vector<1x256xi32>
    %46 = arith.andi %43, %45 : vector<1x256xi1>
    %cst_19 = arith.constant 0.000000e+00 : bf16
    %47 = vector.broadcast %cst_19 : bf16 to vector<32x256xbf16>
    %48 = vector.shape_cast %46 : vector<1x256xi1> to vector<1x256xi1>
    %49 = vector.broadcast %48 : vector<1x256xi1> to vector<32x256xi1>
    %50 = arith.select %49, %41, %47 : vector<32x256xi1>, vector<32x256xbf16>
    %c0_i32_20 = arith.constant 0 : i32
    %51 = vector.broadcast %c0_i32_20 : i32 to vector<1x256xi32>
    %52 = arith.cmpi sge, %38, %51 : vector<1x256xi32>
    %c250_i32 = arith.constant 250 : i32
    %53 = vector.broadcast %c250_i32 : i32 to vector<1x256xi32>
    %54 = arith.cmpi slt, %38, %53 : vector<1x256xi32>
    %55 = arith.andi %52, %54 : vector<1x256xi1>
    %cst_21 = arith.constant 0.000000e+00 : bf16
    %56 = vector.broadcast %cst_21 : bf16 to vector<32x256xbf16>
    %57 = vector.shape_cast %55 : vector<1x256xi1> to vector<1x256xi1>
    %58 = vector.broadcast %57 : vector<1x256xi1> to vector<32x256xi1>
    %59 = arith.select %58, %21, %56 : vector<32x256xi1>, vector<32x256xbf16>
    %60 = vector.extract_strided_slice %21 {offsets = [0, 1], sizes = [32, 255], strides = [1, 1]} : vector<32x256xbf16> to vector<32x255xbf16>
    %cst_22 = arith.constant 0.000000e+00 : bf16
    %61 = vector.broadcast %cst_22 : bf16 to vector<32x1xbf16>
    %62 = tpu.concatenate %60, %61 in 1 : vector<32x255xbf16>, vector<32x1xbf16> -> vector<32x256xbf16>
    %c0_i32_23 = arith.constant 0 : i32
    %63 = vector.broadcast %c0_i32_23 : i32 to vector<1x256xi32>
    %64 = arith.cmpi sge, %38, %63 : vector<1x256xi32>
    %c249_i32 = arith.constant 249 : i32
    %65 = vector.broadcast %c249_i32 : i32 to vector<1x256xi32>
    %66 = arith.cmpi slt, %38, %65 : vector<1x256xi32>
    %67 = arith.andi %64, %66 : vector<1x256xi1>
    %cst_24 = arith.constant 0.000000e+00 : bf16
    %68 = vector.broadcast %cst_24 : bf16 to vector<32x256xbf16>
    %69 = vector.shape_cast %67 : vector<1x256xi1> to vector<1x256xi1>
    %70 = vector.broadcast %69 : vector<1x256xi1> to vector<32x256xi1>
    %71 = arith.select %70, %62, %68 : vector<32x256xi1>, vector<32x256xbf16>
    %72 = tpu.concatenate %50, %59, %71 in 0 : vector<32x256xbf16>, vector<32x256xbf16>, vector<32x256xbf16> -> vector<96x256xbf16>
    %c0_25 = arith.constant 0 : index
    %c0_26 = arith.constant 0 : index
    %73 = vector.load %arg7[%c0_25, %c0_26] : memref<16x96xbf16, #tpu.memory_space<vmem>>, vector<16x96xbf16>
    %cst_27 = arith.constant dense<0.000000e+00> : vector<16x256xf32>
    %74 = tpu.matmul %73, %72, %cst_27 {dimension_numbers = #tpu.dot_dimension_numbers<[1], [0], [0], [1], [0, 0, 1, 1], [], []>} : vector<16x96xbf16>, vector<96x256xbf16>, vector<16x256xf32> -> vector<16x256xf32>
    %c0_28 = arith.constant 0 : index
    %c0_29 = arith.constant 0 : index
    %75 = vector.load %arg8[%c0_28, %c0_29] : memref<16x1xf32, #tpu.memory_space<vmem>>, vector<16x1xf32>
    %76 = vector.broadcast %75 : vector<16x1xf32> to vector<16x256xf32>
    %77 = arith.addf %74, %76 : vector<16x256xf32>
    %c0_30 = arith.constant 0 : index
    %c0_31 = arith.constant 0 : index
    %c0_32 = arith.constant 0 : index
    %78 = vector.load %arg9[%c0_30, %c0_31, %c0_32] : memref<1x16x256xf32, #tpu.memory_space<vmem>>, vector<1x16x256xf32>
    %79 = vector.shape_cast %78 : vector<1x16x256xf32> to vector<16x256xf32>
    %80 = vector.shape_cast %77 : vector<16x256xf32> to vector<1x16x256xf32>
    tpu.vector_store %arg9[%c0_30, %c0_31, %c0_32], %80 {strides = array<i32>} : memref<1x16x256xf32, #tpu.memory_space<vmem>>, vector<1x16x256xf32>,
    return
  }
  func.func @transform_0(%arg0: i32) -> (i32, i32, i32) {
    %c0_i32 = arith.constant 0 : i32
    %c0_i32_0 = arith.constant 0 : i32
    %c0_i32_1 = arith.constant 0 : i32
    return %arg0, %c0_i32, %c0_i32_0 : i32, i32, i32
  }
  func.func @transform_1(%arg0: i32) -> (i32, i32) {
    %c0_i32 = arith.constant 0 : i32
    %c0_i32_0 = arith.constant 0 : i32
    %c0_i32_1 = arith.constant 0 : i32
    return %c0_i32, %c0_i32_0 : i32, i32
  }
  func.func @transform_2(%arg0: i32) -> (i32, i32) {
    %c0_i32 = arith.constant 0 : i32
    %c0_i32_0 = arith.constant 0 : i32
    %c0_i32_1 = arith.constant 0 : i32
    return %c0_i32, %c0_i32_0 : i32, i32
  }
  func.func @transform_3(%arg0: i32) -> (i32, i32) {
    %c0_i32 = arith.constant 0 : i32
    %c0_i32_0 = arith.constant 0 : i32
    %c0_i32_1 = arith.constant 0 : i32
    return %c0_i32, %c0_i32_0 : i32, i32
  }
  func.func @transform_4(%arg0: i32) -> (i32, i32) {
    %c0_i32 = arith.constant 0 : i32
    %c0_i32_0 = arith.constant 0 : i32
    %c0_i32_1 = arith.constant 0 : i32
    return %c0_i32, %c0_i32_0 : i32, i32
  }
  func.func @transform_5(%arg0: i32) -> (i32, i32) {
    %c0_i32 = arith.constant 0 : i32
    %c0_i32_0 = arith.constant 0 : i32
    %c0_i32_1 = arith.constant 0 : i32
    return %c0_i32, %c0_i32_0 : i32, i32
  }
  func.func @transform_6(%arg0: i32) -> (i32, i32) {
    %c0_i32 = arith.constant 0 : i32
    %c0_i32_0 = arith.constant 0 : i32
    %c0_i32_1 = arith.constant 0 : i32
    return %c0_i32, %c0_i32_0 : i32, i32
  }
  func.func @transform_7(%arg0: i32) -> (i32, i32) {
    %c0_i32 = arith.constant 0 : i32
    %c0_i32_0 = arith.constant 0 : i32
    %c0_i32_1 = arith.constant 0 : i32
    return %c0_i32, %c0_i32_0 : i32, i32
  }
  func.func @transform_8(%arg0: i32) -> (i32, i32, i32) {
    %c0_i32 = arith.constant 0 : i32
    %c0_i32_0 = arith.constant 0 : i32
    %c0_i32_1 = arith.constant 0 : i32
    return %arg0, %c0_i32, %c0_i32_0 : i32, i32, i32
  }
}

</mosaic_0001>

<llo_original>
// kernel: tpu_custom_call.1
$region0: #{tpu_custom_call.1}
  #allocation0 [shape = 'u32[]', space=smem, size = 0x4, offset = 0x4, fixed_abs, tag = 'smem constant byte address 0x4 - core index']
  #allocation1 [shape = 'u32[144,128]{1,0:T(1,128)}', space=vmem, size = 0x12000, scoped, tag = 'internal scratch']
  %s0 = inlined_call_operand.hbm [shape: f32[2,48,256], index: 0, kind: input, shape index: {}]
  %s1 = inlined_call_operand.vmem [shape: f32[48,1], index: 1, kind: input, shape index: {}]
  %s2 = inlined_call_operand.vmem [shape: f32[48,1], index: 2, kind: input, shape index: {}]
  %s3 = inlined_call_operand.vmem [shape: bf16[32,48], index: 3, kind: input, shape index: {}]
  %s4 = inlined_call_operand.vmem [shape: f32[32,1], index: 4, kind: input, shape index: {}]
  %s5 = inlined_call_operand.vmem [shape: f32[32,1], index: 5, kind: input, shape index: {}]
  %s6 = inlined_call_operand.vmem [shape: bf16[16,96], index: 6, kind: input, shape index: {}]
  %s7 = inlined_call_operand.vmem [shape: f32[16,1], index: 7, kind: input, shape index: {}]
  %s8 = inlined_call_operand.hbm [shape: f32[2,16,256], index: 8, kind: output, shape index: {}]
  %s9 = sld [smem:[#allocation0]]
  $region69: #{tpu_custom_call.1} parent=0
    _
  %s11 = ssub.s32 1, %s9
  %s12 = scalar_select 0, %s11, %s9
  $region1: #{tpu_custom_call.1} parent=0
    #allocation2 [shape = 'u8[98304]{0}', space=vmem, size = 0x18000, scoped, tag = 'input window, operand 0']
    #allocation3 [shape = 's32[2]{0}', space=sflag, size = 0x8, scoped, tag = 'scoped memory for tpu_custom_call.1']
    #allocation4 [shape = 's32[2]{0}', space=sflag, size = 0x8, scoped, tag = 'scoped memory for tpu_custom_call.1']
    #allocation5 [shape = 'u8[32768]{0}', space=vmem, size = 0x8000, scoped, tag = 'output window, operand 0']
    %13 = vsyncpa [#allocation3], 0
    %s14 = scalar_lea.sflag [#allocation3], 1
    %15 = vsyncpa %s14, 0
    %16 = vsyncpa [#allocation4], 0
    %s17 = scalar_lea.sflag [#allocation4], 1
    %18 = vsyncpa %s17, 0
    loop: start=0, step=1, limit=4
    $region2: #{tpu_custom_call.1} parent=1 // loop_pre_header
      _
    $region3: #{tpu_custom_call.1} parent=1 // loop_header
      %s20 = sphi 0, %s24
      %p21 = scmp.ge.s32.totalorder %s20, 4
      %s30 = sphi 0, %s32
      %s33 = sphi 0, %s30
      %s34 = sphi 0, %s33
      %s50 = sphi 0, %s34
      %s54 = sphi 0, %s54
      %s56 = sphi 0, %s54
      %s57 = sphi 0, %s56
      %s71 = sphi 0, %s57
      %s75 = sphi 0, %s75
      %s77 = sphi 0, %s75
      %s78 = sphi 0, %s77
      %s92 = sphi 0, %s78
      %s96 = sphi 0, %s96
      %s98 = sphi 0, %s96
      %s99 = sphi 0, %s98
      %s113 = sphi 0, %s99
      %s117 = sphi 0, %s117
      %s119 = sphi 0, %s117
      %s120 = sphi 0, %s119
      %s134 = sphi 0, %s120
      %s138 = sphi 0, %s138
      %s140 = sphi 0, %s138
      %s141 = sphi 0, %s140
      %s155 = sphi 0, %s141
      %s159 = sphi 0, %s159
      %s161 = sphi 0, %s159
      %s162 = sphi 0, %s161
      %s176 = sphi 0, %s162
      %s180 = sphi 0, %s180
      %s182 = sphi 0, %s180
      %s183 = sphi 0, %s182
      %s197 = sphi 0, %s183
      %s203 = sphi 0, %s205
      %s206 = sphi 0, %s203
      %s207 = sphi 0, %s206
      %s223 = sphi 0, %s207
    $region4: #{tpu_custom_call.1} parent=1 // loop_header_branch
      %23 = sbr.rel (%p21) target = $region8
    $region5: #{tpu_custom_call.1} parent=1 // loop_body
      %s25 = ssub.s32 %s20, 1
      %s26 = ssub.s32 %s20, 2
      %s27 = sadd.s32 %s20, 1
      %s28 = ssub.s32 %s20, %s27
      %p29 = scmp.eq.s32.totalorder %s28, 0
      %s31 = sadd.s32 %s30, 1
      %s32 = scalar_select %p29, %s30, %s31
      %p35 = pneg %p29
      %p36 = scmp.eq.s32.totalorder %s20, 1
      %p37 = por %p35, %p36
      %p38 = scmp.ne.s32.totalorder %s30, %s33
      %p39 = scmp.eq.s32.totalorder %s20, 0
      %p40 = por %p38, %p39
      %p41 = scmp.ne.s32.totalorder %s30, %s33
      %p42 = scmp.eq.s32.totalorder %s25, 1
      %p43 = por %p41, %p42
      %p44 = scmp.ne.s32.totalorder %s33, %s34
      %p45 = scmp.eq.s32.totalorder %s25, 0
      %p46 = por %p44, %p45
      %p47 = scmp.ne.s32.totalorder %s33, %s34
      %p48 = scmp.eq.s32.totalorder %s26, 1
      %p49 = por %p47, %p48
      %p51 = scmp.ne.s32.totalorder %s34, %s50
      %p52 = scmp.eq.s32.totalorder %s26, 0
      %p53 = por %p51, %p52
      %s55 = sadd.s32 %s54, 1
      %p58 = scmp.eq.s32.totalorder %s20, 1
      %p59 = scmp.ne.s32.totalorder %s54, %s56
      %p60 = scmp.eq.s32.totalorder %s20, 0
      %p61 = por %p59, %p60
      %p62 = scmp.ne.s32.totalorder %s54, %s56
      %p63 = scmp.eq.s32.totalorder %s25, 1
      %p64 = por %p62, %p63
      %p65 = scmp.ne.s32.totalorder %s56, %s57
      %p66 = scmp.eq.s32.totalorder %s25, 0
      %p67 = por %p65, %p66
      %p68 = scmp.ne.s32.totalorder %s56, %s57
      %p69 = scmp.eq.s32.totalorder %s26, 1
      %p70 = por %p68, %p69
      %p72 = scmp.ne.s32.totalorder %s57, %s71
      %p73 = scmp.eq.s32.totalorder %s26, 0
      %p74 = por %p72, %p73
      %s76 = sadd.s32 %s75, 1
      %p79 = scmp.eq.s32.totalorder %s20, 1
      %p80 = scmp.ne.s32.totalorder %s75, %s77
      %p81 = scmp.eq.s32.totalorder %s20, 0
      %p82 = por %p80, %p81
      %p83 = scmp.ne.s32.totalorder %s75, %s77
      %p84 = scmp.eq.s32.totalorder %s25, 1
      %p85 = por %p83, %p84
      %p86 = scmp.ne.s32.totalorder %s77, %s78
      %p87 = scmp.eq.s32.totalorder %s25, 0
      %p88 = por %p86, %p87
      %p89 = scmp.ne.s32.totalorder %s77, %s78
      %p90 = scmp.eq.s32.totalorder %s26, 1
      %p91 = por %p89, %p90
      %p93 = scmp.ne.s32.totalorder %s78, %s92
      %p94 = scmp.eq.s32.totalorder %s26, 0
      %p95 = por %p93, %p94
      %s97 = sadd.s32 %s96, 1
      %p100 = scmp.eq.s32.totalorder %s20, 1
      %p101 = scmp.ne.s32.totalorder %s96, %s98
      %p102 = scmp.eq.s32.totalorder %s20, 0
      %p103 = por %p101, %p102
      %p104 = scmp.ne.s32.totalorder %s96, %s98
      %p105 = scmp.eq.s32.totalorder %s25, 1
      %p106 = por %p104, %p105
      %p107 = scmp.ne.s32.totalorder %s98, %s99
      %p108 = scmp.eq.s32.totalorder %s25, 0
      %p109 = por %p107, %p108
      %p110 = scmp.ne.s32.totalorder %s98, %s99
      %p111 = scmp.eq.s32.totalorder %s26, 1
      %p112 = por %p110, %p111
      %p114 = scmp.ne.s32.totalorder %s99, %s113
      %p115 = scmp.eq.s32.totalorder %s26, 0
      %p116 = por %p114, %p115
      %s118 = sadd.s32 %s117, 1
      %p121 = scmp.eq.s32.totalorder %s20, 1
      %p122 = scmp.ne.s32.totalorder %s117, %s119
      %p123 = scmp.eq.s32.totalorder %s20, 0
      %p124 = por %p122, %p123
      %p125 = scmp.ne.s32.totalorder %s117, %s119
      %p126 = scmp.eq.s32.totalorder %s25, 1
      %p127 = por %p125, %p126
      %p128 = scmp.ne.s32.totalorder %s119, %s120
      %p129 = scmp.eq.s32.totalorder %s25, 0
      %p130 = por %p128, %p129
      %p131 = scmp.ne.s32.totalorder %s119, %s120
      %p132 = scmp.eq.s32.totalorder %s26, 1
      %p133 = por %p131, %p132
      %p135 = scmp.ne.s32.totalorder %s120, %s134
      %p136 = scmp.eq.s32.totalorder %s26, 0
      %p137 = por %p135, %p136
      %s139 = sadd.s32 %s138, 1
      %p142 = scmp.eq.s32.totalorder %s20, 1
      %p143 = scmp.ne.s32.totalorder %s138, %s140
      %p144 = scmp.eq.s32.totalorder %s20, 0
      %p145 = por %p143, %p144
      %p146 = scmp.ne.s32.totalorder %s138, %s140
      %p147 = scmp.eq.s32.totalorder %s25, 1
      %p148 = por %p146, %p147
      %p149 = scmp.ne.s32.totalorder %s140, %s141
      %p150 = scmp.eq.s32.totalorder %s25, 0
      %p151 = por %p149, %p150
      %p152 = scmp.ne.s32.totalorder %s140, %s141
      %p153 = scmp.eq.s32.totalorder %s26, 1
      %p154 = por %p152, %p153
      %p156 = scmp.ne.s32.totalorder %s141, %s155
      %p157 = scmp.eq.s32.totalorder %s26, 0
      %p158 = por %p156, %p157
      %s160 = sadd.s32 %s159, 1
      %p163 = scmp.eq.s32.totalorder %s20, 1
      %p164 = scmp.ne.s32.totalorder %s159, %s161
      %p165 = scmp.eq.s32.totalorder %s20, 0
      %p166 = por %p164, %p165
      %p167 = scmp.ne.s32.totalorder %s159, %s161
      %p168 = scmp.eq.s32.totalorder %s25, 1
      %p169 = por %p167, %p168
      %p170 = scmp.ne.s32.totalorder %s161, %s162
      %p171 = scmp.eq.s32.totalorder %s25, 0
      %p172 = por %p170, %p171
      %p173 = scmp.ne.s32.totalorder %s161, %s162
      %p174 = scmp.eq.s32.totalorder %s26, 1
      %p175 = por %p173, %p174
      %p177 = scmp.ne.s32.totalorder %s162, %s176
      %p178 = scmp.eq.s32.totalorder %s26, 0
      %p179 = por %p177, %p178
      %s181 = sadd.s32 %s180, 1
      %p184 = scmp.eq.s32.totalorder %s20, 1
      %p185 = scmp.ne.s32.totalorder %s180, %s182
      %p186 = scmp.eq.s32.totalorder %s20, 0
      %p187 = por %p185, %p186
      %p188 = scmp.ne.s32.totalorder %s180, %s182
      %p189 = scmp.eq.s32.totalorder %s25, 1
      %p190 = por %p188, %p189
      %p191 = scmp.ne.s32.totalorder %s182, %s183
      %p192 = scmp.eq.s32.totalorder %s25, 0
      %p193 = por %p191, %p192
      %p194 = scmp.ne.s32.totalorder %s182, %s183
      %p195 = scmp.eq.s32.totalorder %s26, 1
      %p196 = por %p194, %p195
      %p198 = scmp.ne.s32.totalorder %s183, %s197
      %p199 = scmp.eq.s32.totalorder %s26, 0
      %p200 = por %p198, %p199
      %s201 = ssub.s32 %s20, %s27
      %p202 = scmp.eq.s32.totalorder %s201, 0
      %s204 = sadd.s32 %s203, 1
      %s205 = scalar_select %p202, %s203, %s204
      %p208 = pneg %p202
      %p209 = scmp.eq.s32.totalorder %s20, 1
      %p210 = por %p208, %p209
      %p211 = scmp.ne.s32.totalorder %s203, %s206
      %p212 = scmp.eq.s32.totalorder %s20, 0
      %p213 = por %p211, %p212
      %p214 = scmp.ne.s32.totalorder %s203, %s206
      %p215 = scmp.eq.s32.totalorder %s25, 1
      %p216 = por %p214, %p215
      %p217 = scmp.ne.s32.totalorder %s206, %s207
      %p218 = scmp.eq.s32.totalorder %s25, 0
      %p219 = por %p217, %p218
      %p220 = scmp.ne.s32.totalorder %s206, %s207
      %p221 = scmp.eq.s32.totalorder %s26, 1
      %p222 = por %p220, %p221
      %p224 = scmp.ne.s32.totalorder %s207, %s223
      %p225 = scmp.eq.s32.totalorder %s26, 0
      %p226 = por %p224, %p225
      %p227 = scmp.le.s32.totalorder 1, %s20
      %p228 = scmp.lt.s32.totalorder %s20, 3
      %p229 = pnand %p227, %p228
      %p230 = pneg %p229
      // Predicated region
      $region9: #{tpu_custom_call.1} parent=5 // pred_check
        _
      $region10: #{tpu_custom_call.1} parent=5 // pred_check_branch
        %232 = sbr.rel (%p229) target = $region12
      $region11: #{tpu_custom_call.1} parent=5 // pred_region
        %s233 = ssub.s32 %s20, 1
        // Predicated region
        $region13: #{tpu_custom_call.1} parent=11 // pred_check
          %p234 = pneg %p67
        $region14: #{tpu_custom_call.1} parent=11 // pred_check_branch
          %236 = sbr.rel (%p234) target = $region16
        $region15: #{tpu_custom_call.1} parent=11 // pred_region
          _
        $region16: #{tpu_custom_call.1} parent=11 // pred_fallthru
          _
        // Predicated region
        $region17: #{tpu_custom_call.1} parent=11 // pred_check
          %p237 = pneg %p88
        $region18: #{tpu_custom_call.1} parent=11 // pred_check_branch
          %239 = sbr.rel (%p237) target = $region20
        $region19: #{tpu_custom_call.1} parent=11 // pred_region
          _
        $region20: #{tpu_custom_call.1} parent=11 // pred_fallthru
          _
        // Predicated region
        $region21: #{tpu_custom_call.1} parent=11 // pred_check
          %p240 = pneg %p109
        $region22: #{tpu_custom_call.1} parent=11 // pred_check_branch
          %242 = sbr.rel (%p240) target = $region24
        $region23: #{tpu_custom_call.1} parent=11 // pred_region
          _
        $region24: #{tpu_custom_call.1} parent=11 // pred_fallthru
          _
        // Predicated region
        $region25: #{tpu_custom_call.1} parent=11 // pred_check
          %p243 = pneg %p130
        $region26: #{tpu_custom_call.1} parent=11 // pred_check_branch
          %245 = sbr.rel (%p243) target = $region28
        $region27: #{tpu_custom_call.1} parent=11 // pred_region
          _
        $region28: #{tpu_custom_call.1} parent=11 // pred_fallthru
          _
        // Predicated region
        $region29: #{tpu_custom_call.1} parent=11 // pred_check
          %p246 = pneg %p151
        $region30: #{tpu_custom_call.1} parent=11 // pred_check_branch
          %248 = sbr.rel (%p246) target = $region32
        $region31: #{tpu_custom_call.1} parent=11 // pred_region
          _
        $region32: #{tpu_custom_call.1} parent=11 // pred_fallthru
          _
        // Predicated region
        $region33: #{tpu_custom_call.1} parent=11 // pred_check
          %p249 = pneg %p172
        $region34: #{tpu_custom_call.1} parent=11 // pred_check_branch
          %251 = sbr.rel (%p249) target = $region36
        $region35: #{tpu_custom_call.1} parent=11 // pred_region
          _
        $region36: #{tpu_custom_call.1} parent=11 // pred_fallthru
          _
        // Predicated region
        $region37: #{tpu_custom_call.1} parent=11 // pred_check
          %p252 = pneg %p193
        $region38: #{tpu_custom_call.1} parent=11 // pred_check_branch
          %254 = sbr.rel (%p252) target = $region40
        $region39: #{tpu_custom_call.1} parent=11 // pred_region
          _
        $region40: #{tpu_custom_call.1} parent=11 // pred_fallthru
          _
      $region12: #{tpu_custom_call.1} parent=5 // pred_fallthru
        _
      %p255 = scmp.lt.s32.totalorder %s20, 2
      // Predicated region
      $region41: #{tpu_custom_call.1} parent=5 // pred_check
        %p256 = pneg %p255
      $region42: #{tpu_custom_call.1} parent=5 // pred_check_branch
        %258 = sbr.rel (%p256) target = $region44
      $region43: #{tpu_custom_call.1} parent=5 // pred_region
        // Predicated region
        $region45: #{tpu_custom_call.1} parent=43 // pred_check
          %p259 = pneg %p40
        $region46: #{tpu_custom_call.1} parent=43 // pred_check_branch
          %261 = sbr.rel (%p259) target = $region48
        $region47: #{tpu_custom_call.1} parent=43 // pred_region
          %s262 = sand.u32 %s30, 1
          %s263 = scalar_lea.sflag [#allocation3], %s262
          %s264 = sand.u32 %s30, 1
          %s265 = smul.addr %s264, 96
          %s266 = scalar_lea.vmem [#allocation2], %s265
          %s268 = ssub.s32 1536, 1536
          %269 = vsyncadd %s263, %s268
          %s270 = smul.addr %s20, 12
          %s271 = smul.addr %s270, 128
          %s272 = scalar_lea.hbm %s0, %s271
          %s273 = sshll.u32 %s266, 4
          %s274 = int_to_ptr.vmem [resolvable:$true] %s273
          %279 = dma.hbm_to_vmem [thread:$0]  %s272, 1536, %s274, %s263, 256, 256, 16
        $region48: #{tpu_custom_call.1} parent=43 // pred_fallthru
          _
      $region44: #{tpu_custom_call.1} parent=5 // pred_fallthru
        _
      %p280 = scmp.le.s32.totalorder 1, %s20
      %p281 = scmp.lt.s32.totalorder %s20, 3
      %p282 = pnand %p280, %p281
      %p283 = pneg %p282
      // Predicated region
      $region49: #{tpu_custom_call.1} parent=5 // pred_check
        _
      $region50: #{tpu_custom_call.1} parent=5 // pred_check_branch
        %285 = sbr.rel (%p282) target = $region52
      $region51: #{tpu_custom_call.1} parent=5 // pred_region
        %s286 = ssub.s32 %s20, 1
        %s287 = sand.u32 %s33, 1
        %s288 = scalar_lea.sflag [#allocation3], %s287
        %s289 = sand.u32 %s33, 1
        %s290 = smul.addr %s289, 96
        %s291 = scalar_lea.vmem [#allocation2], %s290
        // Predicated region
        $region53: #{tpu_custom_call.1} parent=51 // pred_check
          %p292 = pneg %p46
        $region54: #{tpu_custom_call.1} parent=51 // pred_check_branch
          %294 = sbr.rel (%p292) target = $region56
        $region55: #{tpu_custom_call.1} parent=51 // pred_region
          %295 = dma.done %s288, 1536
        $region56: #{tpu_custom_call.1} parent=51 // pred_fallthru
          _
        %s296 = sand.u32 %s33, 1
        %s297 = scalar_lea.sflag [#allocation3], %s296
        %s298 = sand.u32 %s33, 1
        %s299 = smul.addr %s298, 96
        %s300 = scalar_lea.vmem [#allocation2], %s299
        %p301 = pneg %p46
        %p302 = pneg %p43
        %p303 = pneg %p67
        %p304 = pneg %p64
        %p305 = pneg %p88
        %p306 = pneg %p85
        %p307 = pneg %p109
        %p308 = pneg %p106
        %p309 = pneg %p130
        %p310 = pneg %p127
        %p311 = pneg %p151
        %p312 = pneg %p148
        %p313 = pneg %p172
        %p314 = pneg %p169
        %p315 = pneg %p193
        %p316 = pneg %p190
        %p317 = pneg %p219
        %p318 = pneg %p216
        %s319 = sand.u32 %s206, 1
        %s320 = scalar_lea.sflag [#allocation4], %s319
        %s321 = sand.u32 %s206, 1
        %s322 = smul.addr %s321, 32
        %s323 = scalar_lea.vmem [#allocation5], %s322
        %v327 = vld [vmem:[%s1] sm:$0xff]
        %v328 = vld [vmem:[%s1 + $0x8] sm:$0xff]
        %v329 = vld [vmem:[%s1 + $0x10] sm:$0xff]
        %v330 = vld [vmem:[%s1 + $0x18] sm:$0xff]
        %v331 = vld [vmem:[%s1 + $0x20] sm:$0xff]
        %v332 = vld [vmem:[%s1 + $0x28] sm:$0xff]
        %v333 = vld [vmem:[%s2] sm:$0xff]
        %v334 = vld [vmem:[%s2 + $0x8] sm:$0xff]
        %v335 = vld [vmem:[%s2 + $0x10] sm:$0xff]
        %v336 = vld [vmem:[%s2 + $0x18] sm:$0xff]
        %v337 = vld [vmem:[%s2 + $0x20] sm:$0xff]
        %v338 = vld [vmem:[%s2 + $0x28] sm:$0xff]
        %v339 = vld [vmem:[%s4] sm:$0xff]
        %v340 = vld [vmem:[%s4 + $0x8] sm:$0xff]
        %v341 = vld [vmem:[%s4 + $0x10] sm:$0xff]
        %v342 = vld [vmem:[%s4 + $0x18] sm:$0xff]
        %v343 = vld [vmem:[%s5] sm:$0xff]
        %v344 = vld [vmem:[%s5 + $0x8] sm:$0xff]
        %v345 = vld [vmem:[%s5 + $0x10] sm:$0xff]
        %v346 = vld [vmem:[%s5 + $0x18] sm:$0xff]
        %v347 = vld [vmem:[%s291] sm:$0xff]
        %v348 = vld [vmem:[%s291 + $0x8] sm:$0xff]
        %v349 = vld [vmem:[%s291 + $0x10] sm:$0xff]
        %v350 = vld [vmem:[%s291 + $0x18] sm:$0xff]
        %v351 = vld [vmem:[%s291 + $0x20] sm:$0xff]
        %v352 = vld [vmem:[%s291 + $0x28] sm:$0xff]
        %v353 = vld [vmem:[%s291 + $0x30] sm:$0xff]
        %v354 = vld [vmem:[%s291 + $0x38] sm:$0xff]
        %v355 = vld [vmem:[%s291 + $0x40] sm:$0xff]
        %v356 = vld [vmem:[%s291 + $0x48] sm:$0xff]
        %v357 = vld [vmem:[%s291 + $0x50] sm:$0xff]
        %v358 = vld [vmem:[%s291 + $0x58] sm:$0xff]
        %360 = vset.pattern.permute.xlu0 0
        %361 = vperm.xlu0 %360, %v327
        %v362 = vpop.permute.xlu0 %361
        %365 = vset.pattern.permute.xlu0 0
        %366 = vperm.xlu0 %365, %v328
        %v367 = vpop.permute.xlu0 %366
        %370 = vset.pattern.permute.xlu0 0
        %371 = vperm.xlu0 %370, %v329
        %v372 = vpop.permute.xlu0 %371
        %375 = vset.pattern.permute.xlu0 0
        %376 = vperm.xlu0 %375, %v330
        %v377 = vpop.permute.xlu0 %376
        %380 = vset.pattern.permute.xlu0 0
        %381 = vperm.xlu0 %380, %v331
        %v382 = vpop.permute.xlu0 %381
        %385 = vset.pattern.permute.xlu0 0
        %386 = vperm.xlu0 %385, %v332
        %v387 = vpop.permute.xlu0 %386
        %v389 = vmul.f32 %v347, %v362
        %v390 = vmul.f32 %v348, %v362
        %v391 = vmul.f32 %v349, %v367
        %v392 = vmul.f32 %v350, %v367
        %v393 = vmul.f32 %v351, %v372
        %v394 = vmul.f32 %v352, %v372
        %v395 = vmul.f32 %v353, %v377
        %v396 = vmul.f32 %v354, %v377
        %v397 = vmul.f32 %v355, %v382
        %v398 = vmul.f32 %v356, %v382
        %v399 = vmul.f32 %v357, %v387
        %v400 = vmul.f32 %v358, %v387
        %402 = vset.pattern.permute.xlu0 0
        %403 = vperm.xlu0 %402, %v333
        %v404 = vpop.permute.xlu0 %403
        %407 = vset.pattern.permute.xlu0 0
        %408 = vperm.xlu0 %407, %v334
        %v409 = vpop.permute.xlu0 %408
        %412 = vset.pattern.permute.xlu0 0
        %413 = vperm.xlu0 %412, %v335
        %v414 = vpop.permute.xlu0 %413
        %417 = vset.pattern.permute.xlu0 0
        %418 = vperm.xlu0 %417, %v336
        %v419 = vpop.permute.xlu0 %418
        %422 = vset.pattern.permute.xlu0 0
        %423 = vperm.xlu0 %422, %v337
        %v424 = vpop.permute.xlu0 %423
        %427 = vset.pattern.permute.xlu0 0
        %428 = vperm.xlu0 %427, %v338
        %v429 = vpop.permute.xlu0 %428
        %v431 = vadd.f32 %v389, %v404
        %v432 = vadd.f32 %v390, %v404
        %v433 = vadd.f32 %v391, %v409
        %v434 = vadd.f32 %v392, %v409
        %v435 = vadd.f32 %v393, %v414
        %v436 = vadd.f32 %v394, %v414
        %v437 = vadd.f32 %v395, %v419
        %v438 = vadd.f32 %v396, %v419
        %v439 = vadd.f32 %v397, %v424
        %v440 = vadd.f32 %v398, %v424
        %v441 = vadd.f32 %v399, %v429
        %v442 = vadd.f32 %v400, %v429
        %v443 = vmax.f32 %v431, 0.0
        %v444 = vmax.f32 %v432, 0.0
        %v445 = vmax.f32 %v433, 0.0
        %v446 = vmax.f32 %v434, 0.0
        %v447 = vmax.f32 %v435, 0.0
        %v448 = vmax.f32 %v436, 0.0
        %v449 = vmax.f32 %v437, 0.0
        %v450 = vmax.f32 %v438, 0.0
        %v451 = vmax.f32 %v439, 0.0
        %v452 = vmax.f32 %v440, 0.0
        %v453 = vmax.f32 %v441, 0.0
        %v454 = vmax.f32 %v442, 0.0
        %v455 = vld [vmem:[%s3] sm:$0xf]
        %v456 = vld [vmem:[%s3 + $0x4] sm:$0xf]
        %v457 = vld [vmem:[%s3 + $0x8] sm:$0xf]
        %v458 = vld [vmem:[%s3 + $0xc] sm:$0xf]
        %v459 = vpack.c.bf16 %v445, %v443
        %v460 = vpack.c.bf16 %v446, %v444
        %v461 = vpack.c.bf16 %v449, %v447
        %v462 = vpack.c.bf16 %v450, %v448
        %v463 = vpack.c.bf16 %v453, %v451
        %v464 = vpack.c.bf16 %v454, %v452
        %v469 = vunpack.c.l.b16 %v455
        %v470 = vunpack.c.l.b16 %v456
        %v471 = vunpack.c.l.b16 %v457
        %v472 = vunpack.c.l.b16 %v458
        %v473 = vpack.c.b16 %v470, %v469
        %v474 = vpack.c.b16 %v472, %v471
        %vm475 = vcmask 392192
        %v477 = vsel %vm475, %v473, 0
        %v480 = vsel %vm475, %v474, 0
        %482 = vmatprep.subr.bf16.mxu0 %v460
        %483 = vmatpush1.bf16.msra.mxu0 %v459
        %484 = vmatprep.subr.bf16.mxu0 %v462
        %485 = vmatpush1.bf16.msra.mxu0 %v461
        %486 = vmatprep.subr.bf16.mxu0 %v464
        %487 = vmatpush1.bf16.msra.mxu0 %v463
        %488 = vmatprep.subr.bf16.mxu0 0
        %489 = vmatpush1.bf16.msra.mxu0 0
        %490 = vmatprep.subr.bf16.mxu0 0
        %491 = vmatpush1.bf16.msra.mxu0 0
        %492 = vmatprep.subr.bf16.mxu0 0
        %493 = vmatpush1.bf16.msra.mxu0 0
        %494 = vmatprep.subr.bf16.mxu0 0
        %495 = vmatpush1.bf16.msra.mxu0 0
        %496 = vmatprep.subr.bf16.mxu0 0
        %497 = vmatpush1.bf16.msra.mxu0 0
        %498 = vmatprep.subr.bf16.mxu0 0
        %499 = vmatpush1.bf16.msra.mxu0 0
        %500 = vmatprep.subr.bf16.mxu0 0
        %501 = vmatpush1.bf16.msra.mxu0 0
        %502 = vmatprep.subr.bf16.mxu0 0
        %503 = vmatpush1.bf16.msra.mxu0 0
        %504 = vmatprep.subr.bf16.mxu0 0
        %505 = vmatpush1.bf16.msra.mxu0 0
        %506 = vmatprep.subr.bf16.mxu0 0
        %507 = vmatpush1.bf16.msra.mxu0 0
        %508 = vmatprep.subr.bf16.mxu0 0
        %509 = vmatpush1.bf16.msra.mxu0 0
        %510 = vmatprep.subr.bf16.mxu0 0
        %511 = vmatpush1.bf16.msra.mxu0 0
        %512 = vmatprep.subr.bf16.mxu0 0
        %513 = vmatpush1.bf16.msra.mxu0 0
        %514 = vmatprep.mubr.bf16.mxu0 0
        %515 = vmatmul.mubr.bf16.gmra.mrb[0].mxu0 %v477
        %v516 = vpop.f32.mrb[0].mxu0
        %v517 = vadd.f32 0.0, %v516
        %v518 = vpop.f32.mrb[0].mxu0
        %v519 = vadd.f32 0.0, %v518
        %v520 = vpop.f32.mrb[0].mxu0
        %v521 = vadd.f32 0.0, %v520
        %v522 = vpop.f32.mrb[0].mxu0
        %v523 = vadd.f32 0.0, %v522
        %524 = vmatprep.mubr.bf16.mxu0 0
        %525 = vmatmul.mubr.bf16.gmra.mrb[0].mxu0 %v480
        %v526 = vpop.f32.mrb[0].mxu0
        %v527 = vadd.f32 0.0, %v526
        %v528 = vpop.f32.mrb[0].mxu0
        %v529 = vadd.f32 0.0, %v528
        %v530 = vpop.f32.mrb[0].mxu0
        %v531 = vadd.f32 0.0, %v530
        %v532 = vpop.f32.mrb[0].mxu0
        %v533 = vadd.f32 0.0, %v532
        %534 = vdwg.mxu0
        %536 = vset.pattern.permute.xlu0 0
        %537 = vperm.xlu0 %536, %v339
        %v538 = vpop.permute.xlu0 %537
        %541 = vset.pattern.permute.xlu0 0
        %542 = vperm.xlu0 %541, %v340
        %v543 = vpop.permute.xlu0 %542
        %546 = vset.pattern.permute.xlu0 0
        %547 = vperm.xlu0 %546, %v341
        %v548 = vpop.permute.xlu0 %547
        %551 = vset.pattern.permute.xlu0 0
        %552 = vperm.xlu0 %551, %v342
        %v553 = vpop.permute.xlu0 %552
        %v555 = vmul.f32 %v517, %v538
        %v556 = vmul.f32 %v519, %v538
        %v557 = vmul.f32 %v521, %v543
        %v558 = vmul.f32 %v523, %v543
        %v559 = vmul.f32 %v527, %v548
        %v560 = vmul.f32 %v529, %v548
        %v561 = vmul.f32 %v531, %v553
        %v562 = vmul.f32 %v533, %v553
        %564 = vset.pattern.permute.xlu0 0
        %565 = vperm.xlu0 %564, %v343
        %v566 = vpop.permute.xlu0 %565
        %569 = vset.pattern.permute.xlu0 0
        %570 = vperm.xlu0 %569, %v344
        %v571 = vpop.permute.xlu0 %570
        %574 = vset.pattern.permute.xlu0 0
        %575 = vperm.xlu0 %574, %v345
        %v576 = vpop.permute.xlu0 %575
        %579 = vset.pattern.permute.xlu0 0
        %580 = vperm.xlu0 %579, %v346
        %v581 = vpop.permute.xlu0 %580
        %v583 = vadd.f32 %v555, %v566
        %v584 = vadd.f32 %v556, %v566
        %v585 = vadd.f32 %v557, %v571
        %v586 = vadd.f32 %v558, %v571
        %v587 = vadd.f32 %v559, %v576
        %v588 = vadd.f32 %v560, %v576
        %v589 = vadd.f32 %v561, %v581
        %v590 = vadd.f32 %v562, %v581
        %v591 = vmax.f32 %v583, 0.0
        %v592 = vmax.f32 %v584, 0.0
        %v593 = vmax.f32 %v585, 0.0
        %v594 = vmax.f32 %v586, 0.0
        %v595 = vmax.f32 %v587, 0.0
        %v596 = vmax.f32 %v588, 0.0
        %v597 = vmax.f32 %v589, 0.0
        %v598 = vmax.f32 %v590, 0.0
        %v599 = vpack.c.bf16 %v593, %v591
        %v600 = vpack.c.bf16 %v594, %v592
        %v601 = vpack.c.bf16 %v597, %v595
        %v602 = vpack.c.bf16 %v598, %v596
        %v603 = vlaneseq
        %v604 = vand.u32 %v603, 127
        %v605 = vadd.s32 %v604, 128
        %vm606 = vcmp.lt.s32.totalorder %v604, 0
        %v607 = vsub.s32 0, %v604
        %v608 = vsel %vm606, %v607, %v604
        %v609 = vshrl.u32 %v608, 8
        %v610 = vand.u32 %v608, 255
        %v611 = vsub.s32 0, %v610
        %v612 = vsel %vm606, %v611, %v610
        %vm613 = vcmp.lt.s32.totalorder %v605, 0
        %v614 = vsub.s32 0, %v605
        %v615 = vsel %vm613, %v614, %v605
        %v616 = vshrl.u32 %v615, 8
        %v617 = vand.u32 %v615, 255
        %v618 = vsub.s32 0, %v617
        %v619 = vsel %vm613, %v618, %v617
        %vm620 = vcmp.ne.s32.totalorder %v612, 0
        %vm621 = vcmp.ne.s32.totalorder %v619, 0
        %vm622 = vcmp.lt.s32.totalorder %v612, 0
        %vm623 = vcmp.lt.s32.totalorder %v619, 0
        %vm624 = vmand %vm622, %vm620
        %vm625 = vmand %vm623, %vm621
        %v626 = vadd.s32 %v612, 256
        %v627 = vadd.s32 %v619, 256
        %v628 = vsel %vm624, %v626, %v612
        %v629 = vsel %vm625, %v627, %v619
        %634 = vrot.lane.b32.xlu0 %v599, 1
        %v635 = vpop.permute.xlu0 %634
        %636 = vrot.lane.b32.xlu0 %v600, 1
        %v637 = vpop.permute.xlu0 %636
        %638 = vrot.lane.b32.xlu0 %v601, 1
        %v639 = vpop.permute.xlu0 %638
        %640 = vrot.lane.b32.xlu0 %v602, 1
        %v641 = vpop.permute.xlu0 %640
        %vm642 = vcmask 7168
        %v643 = vsel %vm642, %v635, %v637
        %v644 = vsel %vm642, %v639, %v641
        %vm647 = vcmask 7168
        %v650 = vsel %vm647, 0, %v635
        %v653 = vsel %vm647, 0, %v639
        %vm655 = vcmp.ge.s32.totalorder %v628, 1
        %vm656 = vcmp.ge.s32.totalorder %v629, 1
        %vm657 = vcmp.lt.s32.totalorder %v628, 251
        %vm658 = vcmp.lt.s32.totalorder %v629, 251
        %vm659 = vmand %vm655, %vm657
        %vm660 = vmand %vm656, %vm658
        %v661 = vsel %vm659, 1, 0
        %v662 = vsel %vm660, 1, 0
        %vm663 = vcmp.eq.s32.totalorder %v661, 1
        %vm664 = vcmp.eq.s32.totalorder %v662, 1
        %vm665 = vmpackc.low %vm664, %vm663
        %v666 = vsel %vm665, 65537, 0
        %v667 = vlaneseq
        %v668 = vshrl.u32 %v667, 7
        %v669 = vsub.s32 0, %v668
        %v670 = vrot.slane %v666, %v669
        %v671 = vlaneseq
        %v672 = vshrl.u32 %v671, 7
        %v673 = vsub.s32 4, %v672
        %v674 = vrot.slane %v666, %v673
        %vm675 = vcmp.ne.s16.totalorder %v670, 0
        %vm676 = vcmp.ne.s16.totalorder %v674, 0
        %v677 = vsel %vm675, %v650, 0
        %v678 = vsel %vm676, %v643, 0
        %v679 = vsel %vm675, %v653, 0
        %v680 = vsel %vm676, %v644, 0
        %vm681 = vcmp.ge.s32.totalorder %v628, 0
        %vm682 = vcmp.ge.s32.totalorder %v629, 0
        %vm683 = vcmp.lt.s32.totalorder %v628, 250
        %vm684 = vcmp.lt.s32.totalorder %v629, 250
        %vm685 = vmand %vm681, %vm683
        %vm686 = vmand %vm682, %vm684
        %v687 = vsel %vm685, 1, 0
        %v688 = vsel %vm686, 1, 0
        %vm689 = vcmp.eq.s32.totalorder %v687, 1
        %vm690 = vcmp.eq.s32.totalorder %v688, 1
        %vm691 = vmpackc.low %vm690, %vm689
        %v692 = vsel %vm691, 65537, 0
        %v693 = vlaneseq
        %v694 = vshrl.u32 %v693, 7
        %v695 = vsub.s32 0, %v694
        %v696 = vrot.slane %v692, %v695
        %v697 = vlaneseq
        %v698 = vshrl.u32 %v697, 7
        %v699 = vsub.s32 4, %v698
        %v700 = vrot.slane %v692, %v699
        %vm701 = vcmp.ne.s16.totalorder %v696, 0
        %vm702 = vcmp.ne.s16.totalorder %v700, 0
        %v703 = vsel %vm701, %v599, 0
        %v704 = vsel %vm702, %v600, 0
        %v705 = vsel %vm701, %v601, 0
        %v706 = vsel %vm702, %v602, 0
        %707 = vrot.lane.b32.xlu0 %v599, 127
        %v708 = vpop.permute.xlu0 %707
        %709 = vrot.lane.b32.xlu0 %v600, 127
        %v710 = vpop.permute.xlu0 %709
        %711 = vrot.lane.b32.xlu0 %v601, 127
        %v712 = vpop.permute.xlu0 %711
        %713 = vrot.lane.b32.xlu0 %v602, 127
        %v714 = vpop.permute.xlu0 %713
        %vm715 = vcmask 1039360
        %v716 = vsel %vm715, %v708, %v710
        %v717 = vsel %vm715, %v712, %v714
        %vm720 = vcmask 1039360
        %v722 = vsel %vm720, %v710, 0
        %v725 = vsel %vm720, %v714, 0
        %vm727 = vcmp.lt.s32.totalorder %v628, 249
        %vm728 = vcmp.lt.s32.totalorder %v629, 249
        %vm729 = vmand %vm681, %vm727
        %vm730 = vmand %vm682, %vm728
        %v731 = vsel %vm729, 1, 0
        %v732 = vsel %vm730, 1, 0
        %vm733 = vcmp.eq.s32.totalorder %v731, 1
        %vm734 = vcmp.eq.s32.totalorder %v732, 1
        %vm735 = vmpackc.low %vm734, %vm733
        %v736 = vsel %vm735, 65537, 0
        %v737 = vlaneseq
        %v738 = vshrl.u32 %v737, 7
        %v739 = vsub.s32 0, %v738
        %v740 = vrot.slane %v736, %v739
        %v741 = vlaneseq
        %v742 = vshrl.u32 %v741, 7
        %v743 = vsub.s32 4, %v742
        %v744 = vrot.slane %v736, %v743
        %vm745 = vcmp.ne.s16.totalorder %v740, 0
        %vm746 = vcmp.ne.s16.totalorder %v744, 0
        %v747 = vsel %vm745, %v716, 0
        %v748 = vsel %vm746, %v722, 0
        %v749 = vsel %vm745, %v717, 0
        %v750 = vsel %vm746, %v725, 0
        %v751 = vld [vmem:[%s6] sm:$0xf]
        %v752 = vld [vmem:[%s6 + $0x4] sm:$0xf]
        %v753 = vld [vmem:[%s7] sm:$0xff]
        %v754 = vld [vmem:[%s7 + $0x8] sm:$0xff]
        %756 = vset.pattern.permute.xlu0 0
        %757 = vperm.xlu0 %756, %v753
        %v758 = vpop.permute.xlu0 %757
        %761 = vset.pattern.permute.xlu0 0
        %762 = vperm.xlu0 %761, %v754
        %v763 = vpop.permute.xlu0 %762
        %v767 = vunpack.c.l.b16 %v751
        %v768 = vunpack.c.l.b16 %v752
        %v769 = vpack.c.b16 %v768, %v767
        %vm770 = vcmask 785408
        %v772 = vsel %vm770, %v769, 0
        %774 = vmatprep.subr.bf16.mxu0 %v678
        %775 = vmatpush1.bf16.msra.mxu0 %v677
        %776 = vmatprep.subr.bf16.mxu0 %v680
        %777 = vmatpush1.bf16.msra.mxu0 %v679
        %778 = vmatprep.subr.bf16.mxu0 %v704
        %779 = vmatpush1.bf16.msra.mxu0 %v703
        %780 = vmatprep.subr.bf16.mxu0 %v706
        %781 = vmatpush1.bf16.msra.mxu0 %v705
        %782 = vmatprep.subr.bf16.mxu0 %v748
        %783 = vmatpush1.bf16.msra.mxu0 %v747
        %784 = vmatprep.subr.bf16.mxu0 %v750
        %785 = vmatpush1.bf16.msra.mxu0 %v749
        %786 = vmatprep.subr.bf16.mxu0 0
        %787 = vmatpush1.bf16.msra.mxu0 0
        %788 = vmatprep.subr.bf16.mxu0 0
        %789 = vmatpush1.bf16.msra.mxu0 0
        %790 = vmatprep.subr.bf16.mxu0 0
        %791 = vmatpush1.bf16.msra.mxu0 0
        %792 = vmatprep.subr.bf16.mxu0 0
        %793 = vmatpush1.bf16.msra.mxu0 0
        %794 = vmatprep.subr.bf16.mxu0 0
        %795 = vmatpush1.bf16.msra.mxu0 0
        %796 = vmatprep.subr.bf16.mxu0 0
        %797 = vmatpush1.bf16.msra.mxu0 0
        %798 = vmatprep.subr.bf16.mxu0 0
        %799 = vmatpush1.bf16.msra.mxu0 0
        %800 = vmatprep.subr.bf16.mxu0 0
        %801 = vmatpush1.bf16.msra.mxu0 0
        %802 = vmatprep.subr.bf16.mxu0 0
        %803 = vmatpush1.bf16.msra.mxu0 0
        %804 = vmatprep.subr.bf16.mxu0 0
        %805 = vmatpush1.bf16.msra.mxu0 0
        %806 = vmatprep.mubr.bf16.mxu0 0
        %807 = vmatmul.mubr.bf16.gmra.mrb[0].mxu0 %v772
        %v808 = vpop.f32.mrb[0].mxu0
        %v809 = vadd.f32 %v758, %v808
        %v810 = vpop.f32.mrb[0].mxu0
        %v811 = vadd.f32 %v758, %v810
        %v812 = vpop.f32.mrb[0].mxu0
        %v813 = vadd.f32 %v763, %v812
        %v814 = vpop.f32.mrb[0].mxu0
        %v815 = vadd.f32 %v763, %v814
        %816 = vdwg.mxu0
        %817 = vst [vmem:[%s323] sm:$0xff] %v809
        %818 = vst [vmem:[%s323 + $0x8] sm:$0xff] %v811
        %819 = vst [vmem:[%s323 + $0x10] sm:$0xff] %v813
        %820 = vst [vmem:[%s323 + $0x18] sm:$0xff] %v815
        %s821 = sand.u32 %s206, 1
        %s822 = scalar_lea.sflag [#allocation4], %s821
        %s823 = sand.u32 %s206, 1
        %s824 = smul.addr %s823, 32
        %s825 = scalar_lea.vmem [#allocation5], %s824
        // Predicated region
        $region57: #{tpu_custom_call.1} parent=51 // pred_check
          %p826 = pneg %p216
        $region58: #{tpu_custom_call.1} parent=51 // pred_check_branch
          %828 = sbr.rel (%p826) target = $region60
        $region59: #{tpu_custom_call.1} parent=51 // pred_region
          %s830 = ssub.s32 512, 512
          %831 = vsyncadd %s822, %s830
          %s832 = smul.addr %s25, 4
          %s833 = smul.addr %s832, 128
          %s834 = scalar_lea.hbm %s8, %s833
          %s835 = sshll.u32 %s825, 4
          %s836 = int_to_ptr.vmem [resolvable:$true] %s835
          %841 = dma.vmem_to_hbm [thread:$0]  %s836, 512, %s834, %s822, 256, 256, 16
        $region60: #{tpu_custom_call.1} parent=51 // pred_fallthru
          _
      $region52: #{tpu_custom_call.1} parent=5 // pred_fallthru
        _
      %p842 = scmp.le.s32.totalorder 2, %s20
      // Predicated region
      $region61: #{tpu_custom_call.1} parent=5 // pred_check
        %p843 = pneg %p842
      $region62: #{tpu_custom_call.1} parent=5 // pred_check_branch
        %845 = sbr.rel (%p843) target = $region64
      $region63: #{tpu_custom_call.1} parent=5 // pred_region
        %s846 = ssub.s32 %s20, 2
        // Predicated region
        $region65: #{tpu_custom_call.1} parent=63 // pred_check
          %p847 = pneg %p222
        $region66: #{tpu_custom_call.1} parent=63 // pred_check_branch
          %849 = sbr.rel (%p847) target = $region68
        $region67: #{tpu_custom_call.1} parent=63 // pred_region
          %s850 = sand.u32 %s207, 1
          %s851 = scalar_lea.sflag [#allocation4], %s850
          %s852 = sand.u32 %s207, 1
          %s853 = smul.addr %s852, 32
          %s854 = scalar_lea.vmem [#allocation5], %s853
          %855 = dma.done %s851, 512
        $region68: #{tpu_custom_call.1} parent=63 // pred_fallthru
          _
      $region64: #{tpu_custom_call.1} parent=5 // pred_fallthru
        _
    $region6: #{tpu_custom_call.1} parent=1 // loop_footer
      %s24 = sadd.s32 1, %s20
    $region7: #{tpu_custom_call.1} parent=1 // loop_footer_branch
      %19 = sbr.rel target = $region3
    $region8: #{tpu_custom_call.1} parent=1 // loop_exit
      _
    %856 = vsyncpa [#allocation3], 1
    %s857 = scalar_lea.sflag [#allocation3], 1
    %858 = vsyncpa %s857, 1
    %859 = vsyncpa [#allocation4], 1
    %s860 = scalar_lea.sflag [#allocation4], 1
    %861 = vsyncpa %s860, 1

</llo_original>
